<compile_context>
chip_gen: v7x
topology: tpu7x:2x2x1
jax: 0.10.0
libtpu: 0.0.40
codegen_flags: <defaults>
</compile_context>

<pallas_src>
import functools
import itertools

import numpy as np
import jax
import jax.numpy as jnp
from jax.experimental import pallas as pl
from jax.experimental.pallas import tpu as pltpu


# ----------------------------- glue helpers --------------------------------
def _total_order_multi_indices(dim, order):
    """Total-degree truncated multi-index set -> order_mat of shape [P, D]."""
    idx = []
    for total in range(order + 1):
        for comb in itertools.combinations_with_replacement(range(dim), total):
            mi = [0] * dim
            for d in comb:
                mi[d] += 1
            idx.append(mi)
    return np.asarray(idx, dtype=np.int32)


def _univariate_polys_ref(x, order, pc):
    """Pure-JAX reference: x [N, D] -> Psi [D, N, order+1] via recurrence."""
    xt = x.T.astype(jnp.float32)                      # [D, N]
    polys = [jnp.ones_like(xt)]
    if order >= 1:
        polys.append(xt)
    for k in range(1, order):
        if pc == 'legendre':
            nxt = ((2 * k + 1) * xt * polys[k] - k * polys[k - 1]) / (k + 1)
        else:
            nxt = xt * polys[k] - k * polys[k - 1]
        polys.append(nxt)
    return jnp.stack(polys, axis=-1)                  # [D, N, K]


def _round_up(a, b):
    return ((a + b - 1) // b) * b


def _cdiv(a, b):
    return (a + b - 1) // b


# ------------------------------ Pallas kernel -------------------------------
def _pce_l1_kernel(x_ref, y_ref, c_ref, out_ref, *, order_mat, max_deg, pc,
                   nout, tile_rows, tiles_per_core, n_valid):
    ci = pl.program_id(0)        # core (parallel) index
    j = pl.program_id(1)         # N-tile (reduction) index
    P, D = order_mat.shape
    tile_elems = tile_rows * 128

    # ---- fused univariate polynomial recurrence on dense (tile_rows,128) tiles ----
    # Degree 0 is the implicit constant 1 (never materialized).
    polys = []
    for d in range(D):
        xd = x_ref[d]                                        # [tile_rows, 128]
        pd = [None, xd] if max_deg[d] >= 1 else [None]
        for k in range(1, max_deg[d]):
            pk, pkm1 = pd[k], pd[k - 1]
            if pc == 'legendre':
                low = float(k) if pkm1 is None else k * pkm1
                nxt = ((2 * k + 1) * xd * pk - low) / (k + 1)
            else:
                # probabilists' Hermite recurrence (Gaussian inputs).
                # TODO(synk): true pc='apc' builds data-driven orthonormal polys
                # via moment-matrix Gram-Schmidt; Hermite is its Gaussian case.
                low = float(k) if pkm1 is None else k * pkm1
                nxt = xd * pk - low
            pd.append(nxt)
        polys.append(pd)

    # ---- y_pred[m] = sum_p c[p,m] * prod_{d: deg_pd>0} polys[d][deg_pd] ----
    # order_mat is a trace-time constant, so the basis selection costs zero
    # runtime ops; only the actual products / MACs are emitted (pure VPU).
    preds = []
    for m in range(nout):
        acc = None
        for p in range(P):
            cpm = c_ref[p * nout + m]                        # scalar from SMEM
            factors = [polys[d][int(order_mat[p, d])]
                       for d in range(D) if order_mat[p, d] > 0]
            if factors:
                term = factors[0]
                for f in factors[1:]:
                    term = term * f
                term = cpm * term
            else:
                term = cpm                                   # constant basis term
            acc = term if acc is None else acc + term
        preds.append(jnp.broadcast_to(jnp.asarray(acc, jnp.float32),
                                      (tile_rows, 128)))

    # ---- masked L1 partial sums, accumulated lane/sublane-wise (no XLU) ----
    base = (ci * tiles_per_core + j) * tile_elems
    row = jax.lax.broadcasted_iota(jnp.int32, (tile_rows, 128), 0)
    lane = jax.lax.broadcasted_iota(jnp.int32, (tile_rows, 128), 1)
    valid = (base + row * 128 + lane) < n_valid

    partial = None
    for m in range(nout):
        dm = jnp.where(valid, jnp.abs(preds[m] - y_ref[m]), 0.0)
        partial = dm if partial is None else partial + dm

    @pl.when(j == 0)
    def _init():
        out_ref[...] = jnp.zeros_like(out_ref)

    out_ref[...] += partial


# ------------------------------ module wrapper ------------------------------
class CalculatePCELoss:
    """Pallas-TPU re-implementation of the PyTorch CalculatePCELoss forward."""

    def __init__(self, order, order_mat, pc='apc', p_orders=None,
                 sparse_basis=None, norm_factor=None, tile_n=8192):
        self.order = order
        self.order_mat = np.asarray(order_mat, dtype=np.int32)   # [P, D]
        self.pc = pc
        self.p_orders = p_orders          # metadata only (degrees per dim)
        self.sparse_basis = sparse_basis  # optional index subset of basis terms
        self.norm_factor = norm_factor    # optional per-basis normalization
        self.tile_n = tile_n              # samples per pipelined N-tile

    def __call__(self, x, y, c):
        order_mat = self.order_mat
        if self.sparse_basis is not None:
            order_mat = order_mat[np.asarray(self.sparse_basis)]
        P, D = order_mat.shape

        x = jnp.asarray(x, jnp.float32)                 # [N, D]
        N = x.shape[0]

        y2 = jnp.asarray(y, jnp.float32)
        if y2.ndim == 1:
            y2 = y2[:, None]
        M = y2.shape[1]

        c_eff = jnp.asarray(c, jnp.float32)
        if c_eff.ndim == 1:
            c_eff = c_eff[:, None]
        if self.norm_factor is not None:
            c_eff = c_eff / jnp.asarray(self.norm_factor, jnp.float32)[:, None]

        max_deg = tuple(int(m) for m in order_mat.max(axis=0))

        # ---- tiling: N reshaped to (rows, 128) -> dense vreg tiles per dim ----
        rows_needed = _round_up(_cdiv(N, 128), 8)
        req_rows = _round_up(max(self.tile_n // 128, 8), 8)
        tile_rows = min(req_rows, rows_needed)
        n_tiles = _cdiv(rows_needed, tile_rows)
        ncores = 2 if n_tiles >= 2 else 1      # v7x: 2 TCs; 1-TC chips unaffected
        tiles_per_core = _cdiv(n_tiles, ncores)
        rows_total = ncores * tiles_per_core * tile_rows
        n_pad = rows_total * 128

        xt = jnp.zeros((D, n_pad), jnp.float32).at[:, :N].set(x.T)
        xt = xt.reshape(D, rows_total, 128)
        yt = jnp.zeros((M, n_pad), jnp.float32).at[:, :N].set(y2.T)
        yt = yt.reshape(M, rows_total, 128)
        c_flat = c_eff.reshape(-1)                       # [P*M], p-major

        kernel = functools.partial(
            _pce_l1_kernel, order_mat=order_mat, max_deg=max_deg, pc=self.pc,
            nout=M, tile_rows=tile_rows, tiles_per_core=tiles_per_core,
            n_valid=N)

        part = pl.pallas_call(
            kernel,
            out_shape=jax.ShapeDtypeStruct((ncores * tile_rows, 128), jnp.float32),
            grid_spec=pltpu.PrefetchScalarGridSpec(
                num_scalar_prefetch=0,
                grid=(ncores, tiles_per_core),
                in_specs=[
                    # streamed, double-buffered N-tiles (lane-dense, (8,128)-aligned)
                    pl.BlockSpec((D, tile_rows, 128),
                                 lambda ci, j: (0, ci * tiles_per_core + j, 0)),
                    pl.BlockSpec((M, tile_rows, 128),
                                 lambda ci, j: (0, ci * tiles_per_core + j, 0)),
                    # tiny coefficient vector: scalar path (SMEM), read per term
                    pl.BlockSpec(memory_space=pltpu.MemorySpace.SMEM),
                ],
                # resident per-core accumulator block (same index across j)
                out_specs=pl.BlockSpec((tile_rows, 128), lambda ci, j: (ci, 0)),
            ),
            compiler_params=pltpu.CompilerParams(
                dimension_semantics=("parallel", "arbitrary"),
                # explicit, v7x-safe (64 MiB physical VMEM); actual usage << this
                vmem_limit_bytes=32 * 1024 * 1024,
            ),
        )(xt, yt, c_flat)

        # tiny final reduction + mean over the *real* N*M elements in the wrapper
        return jnp.sum(part) / (N * M)


# ----------------------------------- demo -----------------------------------
if __name__ == "__main__":
    # N not a multiple of the tile (exercises masking), several tiles spread
    # over the two-"core" parallel axis (exercises per-core partial slabs).
    N, D, order, M = 2600, 4, 3, 1
    order_mat = _total_order_multi_indices(D, order)             # [35, 4]
    P = order_mat.shape[0]

    key = jax.random.PRNGKey(0)
    kx, ky, kc = jax.random.split(key, 3)
    x = jax.random.normal(kx, (N, D), dtype=jnp.float32)
    y = jax.random.normal(ky, (N, M), dtype=jnp.float32)
    c = 0.1 * jax.random.normal(kc, (P, M), dtype=jnp.float32)   # deterministic "params"

    module = CalculatePCELoss(order, order_mat, pc='apc', tile_n=1024)
    loss = module(x, y, c)
    jax.block_until_ready(loss)

    # pure-JAX reference check (same Hermite basis / L1-mean semantics)
    psi_ref = _univariate_polys_ref(x, order, 'apc')             # [D, N, K]
    phi_ref = jnp.ones((N, P), jnp.float32)
    for d in range(D):
        phi_ref = phi_ref * psi_ref[d][:, order_mat[:, d]]
    ref = jnp.mean(jnp.abs(phi_ref @ c - y))
    np.testing.assert_allclose(np.asarray(loss), np.asarray(ref),
                               rtol=1e-4, atol=1e-4)

    print("KERNEL_OK")
</pallas_src>

<mosaic_0001>
module attributes {stable_mosaic.version = 11 : i64} {
  func.func @_pce_l1_kernel(%arg0: i32, %arg1: i32, %arg2: memref<4x8x128xf32, #tpu.memory_space<vmem>>, %arg3: memref<1x8x128xf32, #tpu.memory_space<vmem>>, %arg4: memref<35xf32, #tpu.memory_space<smem>>, %arg5: memref<8x128xf32, #tpu.memory_space<vmem>>) attributes {dimension_semantics = [#tpu.dimension_semantics<parallel>, #tpu.dimension_semantics<arbitrary>], iteration_bounds = array<i64: 2, 2>, scalar_prefetch = 0 : i64, scratch_operands = 0 : i64, tpu.core_type = #tpu.core_type<tc>, window_params = [{transform_indices = @transform_0, window_bounds = array<i64: 4, 8, 128>}, {transform_indices = @transform_1, window_bounds = array<i64: 1, 8, 128>}, {transform_indices = @transform_2, window_bounds = array<i64: 35>}, {transform_indices = @transform_3, window_bounds = array<i64: 8, 128>}]} {
    %c0 = arith.constant 0 : index
    %c0_0 = arith.constant 0 : index
    %c0_1 = arith.constant 0 : index
    %0 = vector.load %arg2[%c0, %c0_0, %c0_1] : memref<4x8x128xf32, #tpu.memory_space<vmem>>, vector<1x8x128xf32>
    %1 = vector.shape_cast %0 : vector<1x8x128xf32> to vector<8x128xf32>
    %2 = arith.mulf %1, %1 : vector<8x128xf32>
    %cst = arith.constant 1.000000e+00 : f32
    %3 = vector.broadcast %cst : f32 to vector<8x128xf32>
    %4 = arith.subf %2, %3 : vector<8x128xf32>
    %cst_2 = arith.constant 2.000000e+00 : f32
    %5 = vector.broadcast %cst_2 : f32 to vector<8x128xf32>
    %6 = arith.mulf %5, %1 : vector<8x128xf32>
    %7 = arith.mulf %1, %4 : vector<8x128xf32>
    %8 = arith.subf %7, %6 : vector<8x128xf32>
    %c1 = arith.constant 1 : index
    %c0_3 = arith.constant 0 : index
    %c0_4 = arith.constant 0 : index
    %9 = vector.load %arg2[%c1, %c0_3, %c0_4] : memref<4x8x128xf32, #tpu.memory_space<vmem>>, vector<1x8x128xf32>
    %10 = vector.shape_cast %9 : vector<1x8x128xf32> to vector<8x128xf32>
    %11 = arith.mulf %10, %10 : vector<8x128xf32>
    %cst_5 = arith.constant 1.000000e+00 : f32
    %12 = vector.broadcast %cst_5 : f32 to vector<8x128xf32>
    %13 = arith.subf %11, %12 : vector<8x128xf32>
    %cst_6 = arith.constant 2.000000e+00 : f32
    %14 = vector.broadcast %cst_6 : f32 to vector<8x128xf32>
    %15 = arith.mulf %14, %10 : vector<8x128xf32>
    %16 = arith.mulf %10, %13 : vector<8x128xf32>
    %17 = arith.subf %16, %15 : vector<8x128xf32>
    %c2 = arith.constant 2 : index
    %c0_7 = arith.constant 0 : index
    %c0_8 = arith.constant 0 : index
    %18 = vector.load %arg2[%c2, %c0_7, %c0_8] : memref<4x8x128xf32, #tpu.memory_space<vmem>>, vector<1x8x128xf32>
    %19 = vector.shape_cast %18 : vector<1x8x128xf32> to vector<8x128xf32>
    %20 = arith.mulf %19, %19 : vector<8x128xf32>
    %cst_9 = arith.constant 1.000000e+00 : f32
    %21 = vector.broadcast %cst_9 : f32 to vector<8x128xf32>
    %22 = arith.subf %20, %21 : vector<8x128xf32>
    %cst_10 = arith.constant 2.000000e+00 : f32
    %23 = vector.broadcast %cst_10 : f32 to vector<8x128xf32>
    %24 = arith.mulf %23, %19 : vector<8x128xf32>
    %25 = arith.mulf %19, %22 : vector<8x128xf32>
    %26 = arith.subf %25, %24 : vector<8x128xf32>
    %c3 = arith.constant 3 : index
    %c0_11 = arith.constant 0 : index
    %c0_12 = arith.constant 0 : index
    %27 = vector.load %arg2[%c3, %c0_11, %c0_12] : memref<4x8x128xf32, #tpu.memory_space<vmem>>, vector<1x8x128xf32>
    %28 = vector.shape_cast %27 : vector<1x8x128xf32> to vector<8x128xf32>
    %29 = arith.mulf %28, %28 : vector<8x128xf32>
    %cst_13 = arith.constant 1.000000e+00 : f32
    %30 = vector.broadcast %cst_13 : f32 to vector<8x128xf32>
    %31 = arith.subf %29, %30 : vector<8x128xf32>
    %cst_14 = arith.constant 2.000000e+00 : f32
    %32 = vector.broadcast %cst_14 : f32 to vector<8x128xf32>
    %33 = arith.mulf %32, %28 : vector<8x128xf32>
    %34 = arith.mulf %28, %31 : vector<8x128xf32>
    %35 = arith.subf %34, %33 : vector<8x128xf32>
    %c0_15 = arith.constant 0 : index
    %36 = memref.load %arg4[%c0_15] : memref<35xf32, #tpu.memory_space<smem>>
    %c1_16 = arith.constant 1 : index
    %37 = memref.load %arg4[%c1_16] : memref<35xf32, #tpu.memory_space<smem>>
    %38 = vector.broadcast %37 : f32 to vector<8x128xf32>
    %39 = arith.mulf %38, %1 : vector<8x128xf32>
    %40 = vector.broadcast %36 : f32 to vector<8x128xf32>
    %41 = arith.addf %40, %39 : vector<8x128xf32>
    %c2_17 = arith.constant 2 : index
    %42 = memref.load %arg4[%c2_17] : memref<35xf32, #tpu.memory_space<smem>>
    %43 = vector.broadcast %42 : f32 to vector<8x128xf32>
    %44 = arith.mulf %43, %10 : vector<8x128xf32>
    %45 = arith.addf %41, %44 : vector<8x128xf32>
    %c3_18 = arith.constant 3 : index
    %46 = memref.load %arg4[%c3_18] : memref<35xf32, #tpu.memory_space<smem>>
    %47 = vector.broadcast %46 : f32 to vector<8x128xf32>
    %48 = arith.mulf %47, %19 : vector<8x128xf32>
    %49 = arith.addf %45, %48 : vector<8x128xf32>
    %c4 = arith.constant 4 : index
    %50 = memref.load %arg4[%c4] : memref<35xf32, #tpu.memory_space<smem>>
    %51 = vector.broadcast %50 : f32 to vector<8x128xf32>
    %52 = arith.mulf %51, %28 : vector<8x128xf32>
    %53 = arith.addf %49, %52 : vector<8x128xf32>
    %c5 = arith.constant 5 : index
    %54 = memref.load %arg4[%c5] : memref<35xf32, #tpu.memory_space<smem>>
    %55 = vector.broadcast %54 : f32 to vector<8x128xf32>
    %56 = arith.mulf %55, %4 : vector<8x128xf32>
    %57 = arith.addf %53, %56 : vector<8x128xf32>
    %c6 = arith.constant 6 : index
    %58 = memref.load %arg4[%c6] : memref<35xf32, #tpu.memory_space<smem>>
    %59 = arith.mulf %1, %10 : vector<8x128xf32>
    %60 = vector.broadcast %58 : f32 to vector<8x128xf32>
    %61 = arith.mulf %60, %59 : vector<8x128xf32>
    %62 = arith.addf %57, %61 : vector<8x128xf32>
    %c7 = arith.constant 7 : index
    %63 = memref.load %arg4[%c7] : memref<35xf32, #tpu.memory_space<smem>>
    %64 = arith.mulf %1, %19 : vector<8x128xf32>
    %65 = vector.broadcast %63 : f32 to vector<8x128xf32>
    %66 = arith.mulf %65, %64 : vector<8x128xf32>
    %67 = arith.addf %62, %66 : vector<8x128xf32>
    %c8 = arith.constant 8 : index
    %68 = memref.load %arg4[%c8] : memref<35xf32, #tpu.memory_space<smem>>
    %69 = arith.mulf %1, %28 : vector<8x128xf32>
    %70 = vector.broadcast %68 : f32 to vector<8x128xf32>
    %71 = arith.mulf %70, %69 : vector<8x128xf32>
    %72 = arith.addf %67, %71 : vector<8x128xf32>
    %c9 = arith.constant 9 : index
    %73 = memref.load %arg4[%c9] : memref<35xf32, #tpu.memory_space<smem>>
    %74 = vector.broadcast %73 : f32 to vector<8x128xf32>
    %75 = arith.mulf %74, %13 : vector<8x128xf32>
    %76 = arith.addf %72, %75 : vector<8x128xf32>
    %c10 = arith.constant 10 : index
    %77 = memref.load %arg4[%c10] : memref<35xf32, #tpu.memory_space<smem>>
    %78 = arith.mulf %10, %19 : vector<8x128xf32>
    %79 = vector.broadcast %77 : f32 to vector<8x128xf32>
    %80 = arith.mulf %79, %78 : vector<8x128xf32>
    %81 = arith.addf %76, %80 : vector<8x128xf32>
    %c11 = arith.constant 11 : index
    %82 = memref.load %arg4[%c11] : memref<35xf32, #tpu.memory_space<smem>>
    %83 = arith.mulf %10, %28 : vector<8x128xf32>
    %84 = vector.broadcast %82 : f32 to vector<8x128xf32>
    %85 = arith.mulf %84, %83 : vector<8x128xf32>
    %86 = arith.addf %81, %85 : vector<8x128xf32>
    %c12 = arith.constant 12 : index
    %87 = memref.load %arg4[%c12] : memref<35xf32, #tpu.memory_space<smem>>
    %88 = vector.broadcast %87 : f32 to vector<8x128xf32>
    %89 = arith.mulf %88, %22 : vector<8x128xf32>
    %90 = arith.addf %86, %89 : vector<8x128xf32>
    %c13 = arith.constant 13 : index
    %91 = memref.load %arg4[%c13] : memref<35xf32, #tpu.memory_space<smem>>
    %92 = arith.mulf %19, %28 : vector<8x128xf32>
    %93 = vector.broadcast %91 : f32 to vector<8x128xf32>
    %94 = arith.mulf %93, %92 : vector<8x128xf32>
    %95 = arith.addf %90, %94 : vector<8x128xf32>
    %c14 = arith.constant 14 : index
    %96 = memref.load %arg4[%c14] : memref<35xf32, #tpu.memory_space<smem>>
    %97 = vector.broadcast %96 : f32 to vector<8x128xf32>
    %98 = arith.mulf %97, %31 : vector<8x128xf32>
    %99 = arith.addf %95, %98 : vector<8x128xf32>
    %c15 = arith.constant 15 : index
    %100 = memref.load %arg4[%c15] : memref<35xf32, #tpu.memory_space<smem>>
    %101 = vector.broadcast %100 : f32 to vector<8x128xf32>
    %102 = arith.mulf %101, %8 : vector<8x128xf32>
    %103 = arith.addf %99, %102 : vector<8x128xf32>
    %c16 = arith.constant 16 : index
    %104 = memref.load %arg4[%c16] : memref<35xf32, #tpu.memory_space<smem>>
    %105 = arith.mulf %4, %10 : vector<8x128xf32>
    %106 = vector.broadcast %104 : f32 to vector<8x128xf32>
    %107 = arith.mulf %106, %105 : vector<8x128xf32>
    %108 = arith.addf %103, %107 : vector<8x128xf32>
    %c17 = arith.constant 17 : index
    %109 = memref.load %arg4[%c17] : memref<35xf32, #tpu.memory_space<smem>>
    %110 = arith.mulf %4, %19 : vector<8x128xf32>
    %111 = vector.broadcast %109 : f32 to vector<8x128xf32>
    %112 = arith.mulf %111, %110 : vector<8x128xf32>
    %113 = arith.addf %108, %112 : vector<8x128xf32>
    %c18 = arith.constant 18 : index
    %114 = memref.load %arg4[%c18] : memref<35xf32, #tpu.memory_space<smem>>
    %115 = arith.mulf %4, %28 : vector<8x128xf32>
    %116 = vector.broadcast %114 : f32 to vector<8x128xf32>
    %117 = arith.mulf %116, %115 : vector<8x128xf32>
    %118 = arith.addf %113, %117 : vector<8x128xf32>
    %c19 = arith.constant 19 : index
    %119 = memref.load %arg4[%c19] : memref<35xf32, #tpu.memory_space<smem>>
    %120 = arith.mulf %1, %13 : vector<8x128xf32>
    %121 = vector.broadcast %119 : f32 to vector<8x128xf32>
    %122 = arith.mulf %121, %120 : vector<8x128xf32>
    %123 = arith.addf %118, %122 : vector<8x128xf32>
    %c20 = arith.constant 20 : index
    %124 = memref.load %arg4[%c20] : memref<35xf32, #tpu.memory_space<smem>>
    %125 = arith.mulf %1, %10 : vector<8x128xf32>
    %126 = arith.mulf %125, %19 : vector<8x128xf32>
    %127 = vector.broadcast %124 : f32 to vector<8x128xf32>
    %128 = arith.mulf %127, %126 : vector<8x128xf32>
    %129 = arith.addf %123, %128 : vector<8x128xf32>
    %c21 = arith.constant 21 : index
    %130 = memref.load %arg4[%c21] : memref<35xf32, #tpu.memory_space<smem>>
    %131 = arith.mulf %1, %10 : vector<8x128xf32>
    %132 = arith.mulf %131, %28 : vector<8x128xf32>
    %133 = vector.broadcast %130 : f32 to vector<8x128xf32>
    %134 = arith.mulf %133, %132 : vector<8x128xf32>
    %135 = arith.addf %129, %134 : vector<8x128xf32>
    %c22 = arith.constant 22 : index
    %136 = memref.load %arg4[%c22] : memref<35xf32, #tpu.memory_space<smem>>
    %137 = arith.mulf %1, %22 : vector<8x128xf32>
    %138 = vector.broadcast %136 : f32 to vector<8x128xf32>
    %139 = arith.mulf %138, %137 : vector<8x128xf32>
    %140 = arith.addf %135, %139 : vector<8x128xf32>
    %c23 = arith.constant 23 : index
    %141 = memref.load %arg4[%c23] : memref<35xf32, #tpu.memory_space<smem>>
    %142 = arith.mulf %1, %19 : vector<8x128xf32>
    %143 = arith.mulf %142, %28 : vector<8x128xf32>
    %144 = vector.broadcast %141 : f32 to vector<8x128xf32>
    %145 = arith.mulf %144, %143 : vector<8x128xf32>
    %146 = arith.addf %140, %145 : vector<8x128xf32>
    %c24 = arith.constant 24 : index
    %147 = memref.load %arg4[%c24] : memref<35xf32, #tpu.memory_space<smem>>
    %148 = arith.mulf %1, %31 : vector<8x128xf32>
    %149 = vector.broadcast %147 : f32 to vector<8x128xf32>
    %150 = arith.mulf %149, %148 : vector<8x128xf32>
    %151 = arith.addf %146, %150 : vector<8x128xf32>
    %c25 = arith.constant 25 : index
    %152 = memref.load %arg4[%c25] : memref<35xf32, #tpu.memory_space<smem>>
    %153 = vector.broadcast %152 : f32 to vector<8x128xf32>
    %154 = arith.mulf %153, %17 : vector<8x128xf32>
    %155 = arith.addf %151, %154 : vector<8x128xf32>
    %c26 = arith.constant 26 : index
    %156 = memref.load %arg4[%c26] : memref<35xf32, #tpu.memory_space<smem>>
    %157 = arith.mulf %13, %19 : vector<8x128xf32>
    %158 = vector.broadcast %156 : f32 to vector<8x128xf32>
    %159 = arith.mulf %158, %157 : vector<8x128xf32>
    %160 = arith.addf %155, %159 : vector<8x128xf32>
    %c27 = arith.constant 27 : index
    %161 = memref.load %arg4[%c27] : memref<35xf32, #tpu.memory_space<smem>>
    %162 = arith.mulf %13, %28 : vector<8x128xf32>
    %163 = vector.broadcast %161 : f32 to vector<8x128xf32>
    %164 = arith.mulf %163, %162 : vector<8x128xf32>
    %165 = arith.addf %160, %164 : vector<8x128xf32>
    %c28 = arith.constant 28 : index
    %166 = memref.load %arg4[%c28] : memref<35xf32, #tpu.memory_space<smem>>
    %167 = arith.mulf %10, %22 : vector<8x128xf32>
    %168 = vector.broadcast %166 : f32 to vector<8x128xf32>
    %169 = arith.mulf %168, %167 : vector<8x128xf32>
    %170 = arith.addf %165, %169 : vector<8x128xf32>
    %c29 = arith.constant 29 : index
    %171 = memref.load %arg4[%c29] : memref<35xf32, #tpu.memory_space<smem>>
    %172 = arith.mulf %10, %19 : vector<8x128xf32>
    %173 = arith.mulf %172, %28 : vector<8x128xf32>
    %174 = vector.broadcast %171 : f32 to vector<8x128xf32>
    %175 = arith.mulf %174, %173 : vector<8x128xf32>
    %176 = arith.addf %170, %175 : vector<8x128xf32>
    %c30 = arith.constant 30 : index
    %177 = memref.load %arg4[%c30] : memref<35xf32, #tpu.memory_space<smem>>
    %178 = arith.mulf %10, %31 : vector<8x128xf32>
    %179 = vector.broadcast %177 : f32 to vector<8x128xf32>
    %180 = arith.mulf %179, %178 : vector<8x128xf32>
    %181 = arith.addf %176, %180 : vector<8x128xf32>
    %c31 = arith.constant 31 : index
    %182 = memref.load %arg4[%c31] : memref<35xf32, #tpu.memory_space<smem>>
    %183 = vector.broadcast %182 : f32 to vector<8x128xf32>
    %184 = arith.mulf %183, %26 : vector<8x128xf32>
    %185 = arith.addf %181, %184 : vector<8x128xf32>
    %c32 = arith.constant 32 : index
    %186 = memref.load %arg4[%c32] : memref<35xf32, #tpu.memory_space<smem>>
    %187 = arith.mulf %22, %28 : vector<8x128xf32>
    %188 = vector.broadcast %186 : f32 to vector<8x128xf32>
    %189 = arith.mulf %188, %187 : vector<8x128xf32>
    %190 = arith.addf %185, %189 : vector<8x128xf32>
    %c33 = arith.constant 33 : index
    %191 = memref.load %arg4[%c33] : memref<35xf32, #tpu.memory_space<smem>>
    %192 = arith.mulf %19, %31 : vector<8x128xf32>
    %193 = vector.broadcast %191 : f32 to vector<8x128xf32>
    %194 = arith.mulf %193, %192 : vector<8x128xf32>
    %195 = arith.addf %190, %194 : vector<8x128xf32>
    %c34 = arith.constant 34 : index
    %196 = memref.load %arg4[%c34] : memref<35xf32, #tpu.memory_space<smem>>
    %197 = vector.broadcast %196 : f32 to vector<8x128xf32>
    %198 = arith.mulf %197, %35 : vector<8x128xf32>
    %199 = arith.addf %195, %198 : vector<8x128xf32>
    %c2_i32 = arith.constant 2 : i32
    %200 = arith.muli %arg0, %c2_i32 : i32
    %201 = arith.addi %200, %arg1 : i32
    %c1024_i32 = arith.constant 1024 : i32
    %202 = arith.muli %201, %c1024_i32 : i32
    %203 = tpu.iota {dimensions = array<i32: 0>} : vector<8x128xi32>
    %204 = tpu.iota {dimensions = array<i32: 1>} : vector<8x128xi32>
    %c128_i32 = arith.constant 128 : i32
    %205 = vector.broadcast %c128_i32 : i32 to vector<8x128xi32>
    %206 = arith.muli %203, %205 : vector<8x128xi32>
    %207 = vector.broadcast %202 : i32 to vector<8x128xi32>
    %208 = arith.addi %207, %206 : vector<8x128xi32>
    %209 = arith.addi %208, %204 : vector<8x128xi32>
    %c2600_i32 = arith.constant 2600 : i32
    %210 = vector.broadcast %c2600_i32 : i32 to vector<8x128xi32>
    %211 = arith.cmpi slt, %209, %210 : vector<8x128xi32>
    %c0_19 = arith.constant 0 : index
    %c0_20 = arith.constant 0 : index
    %c0_21 = arith.constant 0 : index
    %212 = vector.load %arg3[%c0_19, %c0_20, %c0_21] : memref<1x8x128xf32, #tpu.memory_space<vmem>>, vector<1x8x128xf32>
    %213 = vector.shape_cast %212 : vector<1x8x128xf32> to vector<8x128xf32>
    %214 = arith.subf %199, %213 : vector<8x128xf32>
    %215 = math.absf %214 : vector<8x128xf32>
    %cst_22 = arith.constant 0.000000e+00 : f32
    %216 = vector.broadcast %cst_22 : f32 to vector<8x128xf32>
    %217 = arith.select %211, %215, %216 : vector<8x128xi1>, vector<8x128xf32>
    %c0_i32 = arith.constant 0 : i32
    %218 = arith.cmpi eq, %arg1, %c0_i32 : i32
    %219 = arith.extui %218 : i1 to i32
    %c0_i32_23 = arith.constant 0 : i32
    %220 = arith.cmpi ne, %219, %c0_i32_23 : i32
    scf.if %220 {
      %cst_28 = arith.constant 0.000000e+00 : f32
      %224 = vector.broadcast %cst_28 : f32 to vector<8x128xf32>
      %c0_29 = arith.constant 0 : index
      %c0_30 = arith.constant 0 : index
      %225 = vector.load %arg5[%c0_29, %c0_30] : memref<8x128xf32, #tpu.memory_space<vmem>>, vector<8x128xf32>
      tpu.vector_store %arg5[%c0_29, %c0_30], %224 {strides = array<i32>} : memref<8x128xf32, #tpu.memory_space<vmem>>, vector<8x128xf32>,
    } else {
    }
    %c0_24 = arith.constant 0 : index
    %c0_25 = arith.constant 0 : index
    %221 = vector.load %arg5[%c0_24, %c0_25] : memref<8x128xf32, #tpu.memory_space<vmem>>, vector<8x128xf32>
    %222 = arith.addf %221, %217 : vector<8x128xf32>
    %c0_26 = arith.constant 0 : index
    %c0_27 = arith.constant 0 : index
    %223 = vector.load %arg5[%c0_26, %c0_27] : memref<8x128xf32, #tpu.memory_space<vmem>>, vector<8x128xf32>
    tpu.vector_store %arg5[%c0_26, %c0_27], %222 {strides = array<i32>} : memref<8x128xf32, #tpu.memory_space<vmem>>, vector<8x128xf32>,
    return
  }
  func.func @transform_0(%arg0: i32, %arg1: i32) -> (i32, i32, i32) {
    %c2_i32 = arith.constant 2 : i32
    %0 = arith.muli %arg0, %c2_i32 : i32
    %1 = arith.addi %0, %arg1 : i32
    %c0_i32 = arith.constant 0 : i32
    %c0_i32_0 = arith.constant 0 : i32
    %c0_i32_1 = arith.constant 0 : i32
    return %c0_i32, %1, %c0_i32_0 : i32, i32, i32
  }
  func.func @transform_1(%arg0: i32, %arg1: i32) -> (i32, i32, i32) {
    %c2_i32 = arith.constant 2 : i32
    %0 = arith.muli %arg0, %c2_i32 : i32
    %1 = arith.addi %0, %arg1 : i32
    %c0_i32 = arith.constant 0 : i32
    %c0_i32_0 = arith.constant 0 : i32
    %c0_i32_1 = arith.constant 0 : i32
    return %c0_i32, %1, %c0_i32_0 : i32, i32, i32
  }
  func.func @transform_2(%arg0: i32, %arg1: i32) -> i32 {
    %c0_i32 = arith.constant 0 : i32
    %c0_i32_0 = arith.constant 0 : i32
    return %c0_i32 : i32
  }
  func.func @transform_3(%arg0: i32, %arg1: i32) -> (i32, i32) {
    %c0_i32 = arith.constant 0 : i32
    %c0_i32_0 = arith.constant 0 : i32
    return %arg0, %c0_i32 : i32, i32
  }
}

</mosaic_0001>

<llo_original>
// kernel: tpu_custom_call.1
$region0: #{tpu_custom_call.1}
  #allocation0 [shape = 'u32[]', space=smem, size = 0x4, offset = 0x4, fixed_abs, tag = 'smem constant byte address 0x4 - core index']
  #allocation1 [shape = 'u32[144,128]{1,0:T(1,128)}', space=vmem, size = 0x12000, scoped, tag = 'internal scratch']
  %s0 = inlined_call_operand.hbm [shape: f32[4,32,128], index: 0, kind: input, shape index: {}]
  %s1 = inlined_call_operand.hbm [shape: f32[1,32,128], index: 1, kind: input, shape index: {}]
  %s2 = inlined_call_operand.vmem [shape: f32[35], index: 2, kind: input, shape index: {}]
  %s3 = inlined_call_operand.hbm [shape: f32[16,128], index: 3, kind: output, shape index: {}]
  %s4 = sld [smem:[#allocation0]]
  $region61: #{tpu_custom_call.1} parent=0
    _
  %s6 = ssub.s32 1, %s4
  %s7 = scalar_select 0, %s6, %s4
  $region1: #{tpu_custom_call.1} parent=0
    #allocation2 [shape = 'u8[32768]{0}', space=vmem, size = 0x8000, scoped, tag = 'input window, operand 0']
    #allocation3 [shape = 's32[2]{0}', space=sflag, size = 0x8, scoped, tag = 'scoped memory for tpu_custom_call.1']
    #allocation4 [shape = 's32[2]{0}', space=sflag, size = 0x8, scoped, tag = 'scoped memory for tpu_custom_call.1']
    #allocation5 [shape = 's32[2]{0}', space=sflag, size = 0x8, scoped, tag = 'scoped memory for tpu_custom_call.1']
    #allocation6 [shape = 'u8[8192]{0}', space=vmem, size = 0x2000, scoped, tag = 'input window, operand 1']
    #allocation7 [shape = 's32[2]{0}', space=sflag, size = 0x8, scoped, tag = 'scoped memory for tpu_custom_call.1']
    #allocation8 [shape = 'u8[512]{0}', space=smem, size = 0x200, scoped, tag = 'input window, operand 2, single buffered']
    #allocation9 [shape = 'u8[8192]{0}', space=vmem, size = 0x2000, scoped, tag = 'output window, operand 0']
    %8 = vsyncpa [#allocation3], 0
    %s9 = scalar_lea.sflag [#allocation3], 1
    %10 = vsyncpa %s9, 0
    %11 = vsyncpa [#allocation7], 0
    %s12 = scalar_lea.sflag [#allocation7], 1
    %13 = vsyncpa %s12, 0
    %14 = vsyncpa [#allocation5], 0
    %15 = vsyncpa [#allocation4], 0
    %s16 = scalar_lea.sflag [#allocation4], 1
    %17 = vsyncpa %s16, 0
    loop: start=0, step=1, limit=6
    $region2: #{tpu_custom_call.1} parent=1 // loop_pre_header
      _
    $region3: #{tpu_custom_call.1} parent=1 // loop_header
      %s19 = sphi 0, %s23
      %p20 = scmp.ge.s32.totalorder %s19, 6
      %s26 = sphi 0, %s38
      %s27 = sphi 0, %s34
      %s28 = sphi 0, %s26
      %s29 = sphi 0, %s27
      %s30 = sphi 0, %s28
      %s31 = sphi 0, %s29
      %s45 = sphi 0, %s47
      %s48 = sphi 0, %s45
      %s49 = sphi 0, %s48
      %s65 = sphi 0, %s49
      %s75 = sphi 0, %s77
      %s78 = sphi 0, %s75
      %s79 = sphi 0, %s78
      %s95 = sphi 0, %s79
      %s99 = sphi 0, %s99
      %s101 = sphi 0, %s99
      %s102 = sphi 0, %s101
      %s116 = sphi 0, %s102
      %s122 = sphi 0, %s124
      %s125 = sphi 0, %s122
      %s126 = sphi 0, %s125
      %s142 = sphi 0, %s126
    $region4: #{tpu_custom_call.1} parent=1 // loop_header_branch
      %22 = sbr.rel (%p20) target = $region8
    $region5: #{tpu_custom_call.1} parent=1 // loop_body
      %s24 = ssub.s32 %s19, 1
      %s25 = ssub.s32 %s19, 2
      %s32 = sadd.s32 1, %s27
      %p33 = scmp.ge.s32.totalorder %s32, 2
      %s34 = scalar_select %p33, 0, %s32
      %s35 = sadd.s32 1, %s26
      %s36 = scalar_select %p33, %s35, %s26
      %p37 = scmp.ge.s32.totalorder %s36, 2
      %s38 = scalar_select %p37, 0, %s36
      %s39 = smul.u32 %s26, 2
      %s40 = sadd.s32 %s39, %s27
      %s41 = smul.u32 %s38, 2
      %s42 = sadd.s32 %s41, %s34
      %s43 = ssub.s32 %s40, %s42
      %p44 = scmp.eq.s32.totalorder %s43, 0
      %s46 = sadd.s32 %s45, 1
      %s47 = scalar_select %p44, %s45, %s46
      %p50 = pneg %p44
      %p51 = scmp.eq.s32.totalorder %s19, 3
      %p52 = por %p50, %p51
      %p53 = scmp.ne.s32.totalorder %s45, %s48
      %p54 = scmp.eq.s32.totalorder %s19, 0
      %p55 = por %p53, %p54
      %p56 = scmp.ne.s32.totalorder %s45, %s48
      %p57 = scmp.eq.s32.totalorder %s24, 3
      %p58 = por %p56, %p57
      %p59 = scmp.ne.s32.totalorder %s48, %s49
      %p60 = scmp.eq.s32.totalorder %s24, 0
      %p61 = por %p59, %p60
      %p62 = scmp.ne.s32.totalorder %s48, %s49
      %p63 = scmp.eq.s32.totalorder %s25, 3
      %p64 = por %p62, %p63
      %p66 = scmp.ne.s32.totalorder %s49, %s65
      %p67 = scmp.eq.s32.totalorder %s25, 0
      %p68 = por %p66, %p67
      %s69 = smul.u32 %s26, 2
      %s70 = sadd.s32 %s69, %s27
      %s71 = smul.u32 %s38, 2
      %s72 = sadd.s32 %s71, %s34
      %s73 = ssub.s32 %s70, %s72
      %p74 = scmp.eq.s32.totalorder %s73, 0
      %s76 = sadd.s32 %s75, 1
      %s77 = scalar_select %p74, %s75, %s76
      %p80 = pneg %p74
      %p81 = scmp.eq.s32.totalorder %s19, 3
      %p82 = por %p80, %p81
      %p83 = scmp.ne.s32.totalorder %s75, %s78
      %p84 = scmp.eq.s32.totalorder %s19, 0
      %p85 = por %p83, %p84
      %p86 = scmp.ne.s32.totalorder %s75, %s78
      %p87 = scmp.eq.s32.totalorder %s24, 3
      %p88 = por %p86, %p87
      %p89 = scmp.ne.s32.totalorder %s78, %s79
      %p90 = scmp.eq.s32.totalorder %s24, 0
      %p91 = por %p89, %p90
      %p92 = scmp.ne.s32.totalorder %s78, %s79
      %p93 = scmp.eq.s32.totalorder %s25, 3
      %p94 = por %p92, %p93
      %p96 = scmp.ne.s32.totalorder %s79, %s95
      %p97 = scmp.eq.s32.totalorder %s25, 0
      %p98 = por %p96, %p97
      %s100 = sadd.s32 %s99, 1
      %p103 = scmp.eq.s32.totalorder %s19, 3
      %p104 = scmp.ne.s32.totalorder %s99, %s101
      %p105 = scmp.eq.s32.totalorder %s19, 0
      %p106 = por %p104, %p105
      %p107 = scmp.ne.s32.totalorder %s99, %s101
      %p108 = scmp.eq.s32.totalorder %s24, 3
      %p109 = por %p107, %p108
      %p110 = scmp.ne.s32.totalorder %s101, %s102
      %p111 = scmp.eq.s32.totalorder %s24, 0
      %p112 = por %p110, %p111
      %p113 = scmp.ne.s32.totalorder %s101, %s102
      %p114 = scmp.eq.s32.totalorder %s25, 3
      %p115 = por %p113, %p114
      %p117 = scmp.ne.s32.totalorder %s102, %s116
      %p118 = scmp.eq.s32.totalorder %s25, 0
      %p119 = por %p117, %p118
      %s120 = ssub.s32 %s26, %s38
      %p121 = scmp.eq.s32.totalorder %s120, 0
      %s123 = sadd.s32 %s122, 1
      %s124 = scalar_select %p121, %s122, %s123
      %p127 = pneg %p121
      %p128 = scmp.eq.s32.totalorder %s19, 3
      %p129 = por %p127, %p128
      %p130 = scmp.ne.s32.totalorder %s122, %s125
      %p131 = scmp.eq.s32.totalorder %s19, 0
      %p132 = por %p130, %p131
      %p133 = scmp.ne.s32.totalorder %s122, %s125
      %p134 = scmp.eq.s32.totalorder %s24, 3
      %p135 = por %p133, %p134
      %p136 = scmp.ne.s32.totalorder %s125, %s126
      %p137 = scmp.eq.s32.totalorder %s24, 0
      %p138 = por %p136, %p137
      %p139 = scmp.ne.s32.totalorder %s125, %s126
      %p140 = scmp.eq.s32.totalorder %s25, 3
      %p141 = por %p139, %p140
      %p143 = scmp.ne.s32.totalorder %s126, %s142
      %p144 = scmp.eq.s32.totalorder %s25, 0
      %p145 = por %p143, %p144
      %p146 = scmp.le.s32.totalorder 1, %s19
      %p147 = scmp.lt.s32.totalorder %s19, 5
      %p148 = pnand %p146, %p147
      %p149 = pneg %p148
      // Predicated region
      $region9: #{tpu_custom_call.1} parent=5 // pred_check
        _
      $region10: #{tpu_custom_call.1} parent=5 // pred_check_branch
        %151 = sbr.rel (%p148) target = $region12
      $region11: #{tpu_custom_call.1} parent=5 // pred_region
        %s152 = ssub.s32 %s19, 1
        // Predicated region
        $region13: #{tpu_custom_call.1} parent=11 // pred_check
          %p153 = pneg %p112
        $region14: #{tpu_custom_call.1} parent=11 // pred_check_branch
          %155 = sbr.rel (%p153) target = $region16
        $region15: #{tpu_custom_call.1} parent=11 // pred_region
          %s157 = ssub.s32 16, 16
          %158 = vsyncadd [#allocation5], %s157
          %s160 = sshll.u32 %s2, 4
          %s161 = int_to_ptr.vmem [resolvable:$true] %s160
          %163 = dma.vmem_to_smem %s161, 16, [#allocation8], [#allocation5]
        $region16: #{tpu_custom_call.1} parent=11 // pred_fallthru
          _
      $region12: #{tpu_custom_call.1} parent=5 // pred_fallthru
        _
      %p164 = scmp.lt.s32.totalorder %s19, 4
      // Predicated region
      $region17: #{tpu_custom_call.1} parent=5 // pred_check
        %p165 = pneg %p164
      $region18: #{tpu_custom_call.1} parent=5 // pred_check_branch
        %167 = sbr.rel (%p165) target = $region20
      $region19: #{tpu_custom_call.1} parent=5 // pred_region
        // Predicated region
        $region21: #{tpu_custom_call.1} parent=19 // pred_check
          %p168 = pneg %p55
        $region22: #{tpu_custom_call.1} parent=19 // pred_check_branch
          %170 = sbr.rel (%p168) target = $region24
        $region23: #{tpu_custom_call.1} parent=19 // pred_region
          %s171 = sand.u32 %s45, 1
          %s172 = scalar_lea.sflag [#allocation3], %s171
          %s173 = sand.u32 %s45, 1
          %s174 = smul.addr %s173, 32
          %s175 = scalar_lea.vmem [#allocation2], %s174
          %s176 = smul.u32 %s26, 2
          %s177 = sadd.s32 %s176, %s27
          %s179 = ssub.s32 512, 512
          %180 = vsyncadd %s172, %s179
          %s181 = smul.addr %s177, 128
          %s182 = scalar_lea.hbm %s0, %s181
          %s183 = sshll.u32 %s175, 4
          %s184 = int_to_ptr.vmem [resolvable:$true] %s183
          %189 = dma.hbm_to_vmem [thread:$0]  %s182, 512, %s184, %s172, 512, 128, 8
        $region24: #{tpu_custom_call.1} parent=19 // pred_fallthru
          _
        // Predicated region
        $region25: #{tpu_custom_call.1} parent=19 // pred_check
          %p190 = pneg %p85
        $region26: #{tpu_custom_call.1} parent=19 // pred_check_branch
          %192 = sbr.rel (%p190) target = $region28
        $region27: #{tpu_custom_call.1} parent=19 // pred_region
          %s193 = sand.u32 %s75, 1
          %s194 = scalar_lea.sflag [#allocation7], %s193
          %s195 = sand.u32 %s75, 1
          %s196 = smul.addr %s195, 8
          %s197 = scalar_lea.vmem [#allocation6], %s196
          %s198 = smul.u32 %s26, 2
          %s199 = sadd.s32 %s198, %s27
          %s201 = ssub.s32 128, 128
          %202 = vsyncadd %s194, %s201
          %s203 = smul.addr %s199, 128
          %s204 = scalar_lea.hbm %s1, %s203
          %s206 = sshll.u32 %s197, 4
          %s207 = int_to_ptr.vmem [resolvable:$true] %s206
          %209 = dma.hbm_to_vmem [thread:$0]  %s204, 128, %s207, %s194
        $region28: #{tpu_custom_call.1} parent=19 // pred_fallthru
          _
      $region20: #{tpu_custom_call.1} parent=5 // pred_fallthru
        _
      %p210 = scmp.le.s32.totalorder 1, %s19
      %p211 = scmp.lt.s32.totalorder %s19, 5
      %p212 = pnand %p210, %p211
      %p213 = pneg %p212
      // Predicated region
      $region29: #{tpu_custom_call.1} parent=5 // pred_check
        _
      $region30: #{tpu_custom_call.1} parent=5 // pred_check_branch
        %215 = sbr.rel (%p212) target = $region32
      $region31: #{tpu_custom_call.1} parent=5 // pred_region
        %s216 = ssub.s32 %s19, 1
        %s217 = sand.u32 %s48, 1
        %s218 = scalar_lea.sflag [#allocation3], %s217
        %s219 = sand.u32 %s48, 1
        %s220 = smul.addr %s219, 32
        %s221 = scalar_lea.vmem [#allocation2], %s220
        // Predicated region
        $region33: #{tpu_custom_call.1} parent=31 // pred_check
          %p222 = pneg %p61
        $region34: #{tpu_custom_call.1} parent=31 // pred_check_branch
          %224 = sbr.rel (%p222) target = $region36
        $region35: #{tpu_custom_call.1} parent=31 // pred_region
          %225 = dma.done %s218, 512
        $region36: #{tpu_custom_call.1} parent=31 // pred_fallthru
          _
        %s226 = sand.u32 %s78, 1
        %s227 = scalar_lea.sflag [#allocation7], %s226
        %s228 = sand.u32 %s78, 1
        %s229 = smul.addr %s228, 8
        %s230 = scalar_lea.vmem [#allocation6], %s229
        // Predicated region
        $region37: #{tpu_custom_call.1} parent=31 // pred_check
          %p231 = pneg %p91
        $region38: #{tpu_custom_call.1} parent=31 // pred_check_branch
          %233 = sbr.rel (%p231) target = $region40
        $region39: #{tpu_custom_call.1} parent=31 // pred_region
          %234 = dma.done %s227, 128
        $region40: #{tpu_custom_call.1} parent=31 // pred_fallthru
          _
        // Predicated region
        $region41: #{tpu_custom_call.1} parent=31 // pred_check
          %p235 = pneg %p112
        $region42: #{tpu_custom_call.1} parent=31 // pred_check_branch
          %237 = sbr.rel (%p235) target = $region44
        $region43: #{tpu_custom_call.1} parent=31 // pred_region
          %238 = dma.done [#allocation5], 16
        $region44: #{tpu_custom_call.1} parent=31 // pred_fallthru
          _
        %239 = sfence
        %s240 = sand.u32 %s48, 1
        %s241 = scalar_lea.sflag [#allocation3], %s240
        %s242 = sand.u32 %s48, 1
        %s243 = smul.addr %s242, 32
        %s244 = scalar_lea.vmem [#allocation2], %s243
        %p245 = pneg %p61
        %p246 = pneg %p58
        %s247 = sand.u32 %s78, 1
        %s248 = scalar_lea.sflag [#allocation7], %s247
        %s249 = sand.u32 %s78, 1
        %s250 = smul.addr %s249, 8
        %s251 = scalar_lea.vmem [#allocation6], %s250
        %p252 = pneg %p91
        %p253 = pneg %p88
        %p254 = pneg %p112
        %p255 = pneg %p109
        %p256 = pneg %p138
        %p257 = pneg %p135
        %s258 = sand.u32 %s125, 1
        %s259 = scalar_lea.sflag [#allocation4], %s258
        %s260 = sand.u32 %s125, 1
        %s261 = smul.addr %s260, 8
        %s262 = scalar_lea.vmem [#allocation9], %s261
        %s263 = smul.u32 %s28, 2
        %s264 = sadd.s32 %s263, %s29
        %s265 = smul.u32 %s28, 2
        %s266 = sadd.s32 %s265, %s29
        %v267 = vld [vmem:[%s221] sm:$0xff]
        %v268 = vmul.f32 %v267, %v267
        %v269 = vsub.f32 %v268, 1.0
        %v270 = vmul.f32 %v267, 2.0
        %v271 = vmul.f32 %v267, %v269
        %v272 = vsub.f32 %v271, %v270
        %s273 = scalar_lea.vmem %s221, 8 [#allocation2]
        %v274 = vld [vmem:[%s273] sm:$0xff]
        %v275 = vmul.f32 %v274, %v274
        %v276 = vsub.f32 %v275, 1.0
        %v277 = vmul.f32 %v274, 2.0
        %v278 = vmul.f32 %v274, %v276
        %v279 = vsub.f32 %v278, %v277
        %s280 = scalar_lea.vmem %s221, 16 [#allocation2]
        %v281 = vld [vmem:[%s280] sm:$0xff]
        %v282 = vmul.f32 %v281, %v281
        %v283 = vsub.f32 %v282, 1.0
        %v284 = vmul.f32 %v281, 2.0
        %v285 = vmul.f32 %v281, %v283
        %v286 = vsub.f32 %v285, %v284
        %s287 = scalar_lea.vmem %s221, 24 [#allocation2]
        %v288 = vld [vmem:[%s287] sm:$0xff]
        %v289 = vmul.f32 %v288, %v288
        %v290 = vsub.f32 %v289, 1.0
        %v291 = vmul.f32 %v288, 2.0
        %v292 = vmul.f32 %v288, %v290
        %v293 = vsub.f32 %v292, %v291
        %s294 = sld [smem:[#allocation8]]
        %s295 = sld [smem:[#allocation8 + $0x1]]
        %v296 = vstv %s295
        %v297 = vmul.f32 %v296, %v267
        %v298 = vstv %s294
        %v299 = vadd.f32 %v298, %v297
        %s300 = sld [smem:[#allocation8 + $0x2]]
        %v301 = vstv %s300
        %v302 = vmul.f32 %v301, %v274
        %v303 = vadd.f32 %v299, %v302
        %s304 = sld [smem:[#allocation8 + $0x3]]
        %v305 = vstv %s304
        %v306 = vmul.f32 %v305, %v281
        %v307 = vadd.f32 %v303, %v306
        %s308 = sld [smem:[#allocation8 + $0x4]]
        %v309 = vstv %s308
        %v310 = vmul.f32 %v309, %v288
        %v311 = vadd.f32 %v307, %v310
        %s312 = sld [smem:[#allocation8 + $0x5]]
        %v313 = vstv %s312
        %v314 = vmul.f32 %v313, %v269
        %v315 = vadd.f32 %v311, %v314
        %s316 = sld [smem:[#allocation8 + $0x6]]
        %v317 = vmul.f32 %v267, %v274
        %v318 = vstv %s316
        %v319 = vmul.f32 %v318, %v317
        %v320 = vadd.f32 %v315, %v319
        %s321 = sld [smem:[#allocation8 + $0x7]]
        %v322 = vmul.f32 %v267, %v281
        %v323 = vstv %s321
        %v324 = vmul.f32 %v323, %v322
        %v325 = vadd.f32 %v320, %v324
        %s326 = sld [smem:[#allocation8 + $0x8]]
        %v327 = vmul.f32 %v267, %v288
        %v328 = vstv %s326
        %v329 = vmul.f32 %v328, %v327
        %v330 = vadd.f32 %v325, %v329
        %s331 = sld [smem:[#allocation8 + $0x9]]
        %v332 = vstv %s331
        %v333 = vmul.f32 %v332, %v276
        %v334 = vadd.f32 %v330, %v333
        %s335 = sld [smem:[#allocation8 + $0xa]]
        %v336 = vmul.f32 %v274, %v281
        %v337 = vstv %s335
        %v338 = vmul.f32 %v337, %v336
        %v339 = vadd.f32 %v334, %v338
        %s340 = sld [smem:[#allocation8 + $0xb]]
        %v341 = vmul.f32 %v274, %v288
        %v342 = vstv %s340
        %v343 = vmul.f32 %v342, %v341
        %v344 = vadd.f32 %v339, %v343
        %s345 = sld [smem:[#allocation8 + $0xc]]
        %v346 = vstv %s345
        %v347 = vmul.f32 %v346, %v283
        %v348 = vadd.f32 %v344, %v347
        %s349 = sld [smem:[#allocation8 + $0xd]]
        %v350 = vmul.f32 %v281, %v288
        %v351 = vstv %s349
        %v352 = vmul.f32 %v351, %v350
        %v353 = vadd.f32 %v348, %v352
        %s354 = sld [smem:[#allocation8 + $0xe]]
        %v355 = vstv %s354
        %v356 = vmul.f32 %v355, %v290
        %v357 = vadd.f32 %v353, %v356
        %s358 = sld [smem:[#allocation8 + $0xf]]
        %v359 = vstv %s358
        %v360 = vmul.f32 %v359, %v272
        %v361 = vadd.f32 %v357, %v360
        %s362 = sld [smem:[#allocation8 + $0x10]]
        %v363 = vmul.f32 %v269, %v274
        %v364 = vstv %s362
        %v365 = vmul.f32 %v364, %v363
        %v366 = vadd.f32 %v361, %v365
        %s367 = sld [smem:[#allocation8 + $0x11]]
        %v368 = vmul.f32 %v269, %v281
        %v369 = vstv %s367
        %v370 = vmul.f32 %v369, %v368
        %v371 = vadd.f32 %v366, %v370
        %s372 = sld [smem:[#allocation8 + $0x12]]
        %v373 = vmul.f32 %v269, %v288
        %v374 = vstv %s372
        %v375 = vmul.f32 %v374, %v373
        %v376 = vadd.f32 %v371, %v375
        %s377 = sld [smem:[#allocation8 + $0x13]]
        %v378 = vmul.f32 %v267, %v276
        %v379 = vstv %s377
        %v380 = vmul.f32 %v379, %v378
        %v381 = vadd.f32 %v376, %v380
        %s382 = sld [smem:[#allocation8 + $0x14]]
        %v383 = vmul.f32 %v317, %v281
        %v384 = vstv %s382
        %v385 = vmul.f32 %v384, %v383
        %v386 = vadd.f32 %v381, %v385
        %s387 = sld [smem:[#allocation8 + $0x15]]
        %v388 = vmul.f32 %v317, %v288
        %v389 = vstv %s387
        %v390 = vmul.f32 %v389, %v388
        %v391 = vadd.f32 %v386, %v390
        %s392 = sld [smem:[#allocation8 + $0x16]]
        %v393 = vmul.f32 %v267, %v283
        %v394 = vstv %s392
        %v395 = vmul.f32 %v394, %v393
        %v396 = vadd.f32 %v391, %v395
        %s397 = sld [smem:[#allocation8 + $0x17]]
        %v398 = vmul.f32 %v322, %v288
        %v399 = vstv %s397
        %v400 = vmul.f32 %v399, %v398
        %v401 = vadd.f32 %v396, %v400
        %s402 = sld [smem:[#allocation8 + $0x18]]
        %v403 = vmul.f32 %v267, %v290
        %v404 = vstv %s402
        %v405 = vmul.f32 %v404, %v403
        %v406 = vadd.f32 %v401, %v405
        %s407 = sld [smem:[#allocation8 + $0x19]]
        %v408 = vstv %s407
        %v409 = vmul.f32 %v408, %v279
        %v410 = vadd.f32 %v406, %v409
        %s411 = sld [smem:[#allocation8 + $0x1a]]
        %v412 = vmul.f32 %v276, %v281
        %v413 = vstv %s411
        %v414 = vmul.f32 %v413, %v412
        %v415 = vadd.f32 %v410, %v414
        %s416 = sld [smem:[#allocation8 + $0x1b]]
        %v417 = vmul.f32 %v276, %v288
        %v418 = vstv %s416
        %v419 = vmul.f32 %v418, %v417
        %v420 = vadd.f32 %v415, %v419
        %s421 = sld [smem:[#allocation8 + $0x1c]]
        %v422 = vmul.f32 %v274, %v283
        %v423 = vstv %s421
        %v424 = vmul.f32 %v423, %v422
        %v425 = vadd.f32 %v420, %v424
        %s426 = sld [smem:[#allocation8 + $0x1d]]
        %v427 = vmul.f32 %v336, %v288
        %v428 = vstv %s426
        %v429 = vmul.f32 %v428, %v427
        %v430 = vadd.f32 %v425, %v429
        %s431 = sld [smem:[#allocation8 + $0x1e]]
        %v432 = vmul.f32 %v274, %v290
        %v433 = vstv %s431
        %v434 = vmul.f32 %v433, %v432
        %v435 = vadd.f32 %v430, %v434
        %s436 = sld [smem:[#allocation8 + $0x1f]]
        %v437 = vstv %s436
        %v438 = vmul.f32 %v437, %v286
        %v439 = vadd.f32 %v435, %v438
        %s440 = sld [smem:[#allocation8 + $0x20]]
        %v441 = vmul.f32 %v283, %v288
        %v442 = vstv %s440
        %v443 = vmul.f32 %v442, %v441
        %v444 = vadd.f32 %v439, %v443
        %s445 = sld [smem:[#allocation8 + $0x21]]
        %v446 = vmul.f32 %v281, %v290
        %v447 = vstv %s445
        %v448 = vmul.f32 %v447, %v446
        %v449 = vadd.f32 %v444, %v448
        %s450 = sld [smem:[#allocation8 + $0x22]]
        %v451 = vstv %s450
        %v452 = vmul.f32 %v451, %v293
        %v453 = vadd.f32 %v449, %v452
        %s454 = smul.u32 %s28, 2
        %s455 = sadd.s32 %s454, %s29
        %s456 = smul.u32 %s455, 1024
        %v457 = vlaneseq
        %v458 = vshrl.u32 %v457, 7
        %v459 = vlaneseq
        %v460 = vand.u32 %v459, 127
        %v461 = vmul.u32 %v458, 128
        %v462 = vstv %s456
        %v463 = vadd.s32 %v462, %v461
        %v464 = vadd.s32 %v463, %v460
        %vm465 = vcmp.lt.s32.totalorder %v464, 2600
        %v466 = vld [vmem:[%s230] sm:$0xff]
        %v467 = vsub.f32 %v453, %v466
        %v468 = vand.u32 2147483647, %v467
        %v469 = vsel %vm465, %v468, 0.0
        %p470 = scmp.eq.s32.totalorder %s29, 0
        // Predicated region
        $region45: #{tpu_custom_call.1} parent=31 // pred_check
          %p471 = pneg %p470
        $region46: #{tpu_custom_call.1} parent=31 // pred_check_branch
          %473 = sbr.rel (%p471) target = $region48
        $region47: #{tpu_custom_call.1} parent=31 // pred_region
          %474 = vst [vmem:[%s262] sm:$0xff] 0.0
        $region48: #{tpu_custom_call.1} parent=31 // pred_fallthru
          _
        %v475 = vld [vmem:[%s262] sm:$0xff]
        %v476 = vadd.f32 %v475, %v469
        %477 = vst [vmem:[%s262] sm:$0xff] %v476
        %s478 = sand.u32 %s125, 1
        %s479 = scalar_lea.sflag [#allocation4], %s478
        %s480 = sand.u32 %s125, 1
        %s481 = smul.addr %s480, 8
        %s482 = scalar_lea.vmem [#allocation9], %s481
        // Predicated region
        $region49: #{tpu_custom_call.1} parent=31 // pred_check
          %p483 = pneg %p135
        $region50: #{tpu_custom_call.1} parent=31 // pred_check_branch
          %485 = sbr.rel (%p483) target = $region52
        $region51: #{tpu_custom_call.1} parent=31 // pred_region
          %s487 = ssub.s32 128, 128
          %488 = vsyncadd %s479, %s487
          %s489 = smul.addr %s28, 128
          %s490 = scalar_lea.hbm %s3, %s489
          %s492 = sshll.u32 %s482, 4
          %s493 = int_to_ptr.vmem [resolvable:$true] %s492
          %495 = dma.vmem_to_hbm [thread:$0]  %s493, 128, %s490, %s479
        $region52: #{tpu_custom_call.1} parent=31 // pred_fallthru
          _
      $region32: #{tpu_custom_call.1} parent=5 // pred_fallthru
        _
      %p496 = scmp.le.s32.totalorder 2, %s19
      // Predicated region
      $region53: #{tpu_custom_call.1} parent=5 // pred_check
        %p497 = pneg %p496
      $region54: #{tpu_custom_call.1} parent=5 // pred_check_branch
        %499 = sbr.rel (%p497) target = $region56
      $region55: #{tpu_custom_call.1} parent=5 // pred_region
        %s500 = ssub.s32 %s19, 2
        // Predicated region
        $region57: #{tpu_custom_call.1} parent=55 // pred_check
          %p501 = pneg %p141
        $region58: #{tpu_custom_call.1} parent=55 // pred_check_branch
          %503 = sbr.rel (%p501) target = $region60
        $region59: #{tpu_custom_call.1} parent=55 // pred_region
          %s504 = sand.u32 %s126, 1
          %s505 = scalar_lea.sflag [#allocation4], %s504
          %s506 = sand.u32 %s126, 1
          %s507 = smul.addr %s506, 8
          %s508 = scalar_lea.vmem [#allocation9], %s507
          %509 = dma.done %s505, 128
        $region60: #{tpu_custom_call.1} parent=55 // pred_fallthru
          _
      $region56: #{tpu_custom_call.1} parent=5 // pred_fallthru
        _
    $region6: #{tpu_custom_call.1} parent=1 // loop_footer
      %s23 = sadd.s32 1, %s19
    $region7: #{tpu_custom_call.1} parent=1 // loop_footer_branch
      %18 = sbr.rel target = $region3
    $region8: #{tpu_custom_call.1} parent=1 // loop_exit
      _
    %510 = vsyncpa [#allocation3], 1
    %s511 = scalar_lea.sflag [#allocation3], 1
    %512 = vsyncpa %s511, 1
    %513 = vsyncpa [#allocation7], 1
    %s514 = scalar_lea.sflag [#allocation7], 1
    %515 = vsyncpa %s514, 1
    %516 = vsyncpa [#allocation4], 1
    %s517 = scalar_lea.sflag [#allocation4], 1
    %518 = vsyncpa %s517, 1
    %519 = vsyncpa [#allocation5], 1
    %s520 = scalar_lea.sflag [#allocation5], 1
    %521 = vsyncpa %s520, 1

</llo_original>
